<compile_context>
chip_gen: v7x
topology: tpu7x:2x2x1
jax: 0.10.0
libtpu: 0.0.40
codegen_flags: <defaults>
</compile_context>

<pallas_src>
import functools

import jax
import jax.numpy as jnp
from jax.experimental import pallas as pl
from jax.experimental.pallas import tpu as pltpu

LANE = 128


# ----------------------------------------------------------------------------- utils
def _round_up(x, m):
    return (x + m - 1) // m * m


def _same_pads(kernel_size, stride):
    """TF-'SAME' padding per the reference get_padding_shape: (before, after) per dim."""
    pads = []
    for k, s in zip(kernel_size, stride):
        pad_along = max(k - s, 0)
        before = pad_along // 2
        pads.append((before, pad_along - before))
    return tuple(pads)


def _ceil_out(padded, k, s):
    """ceil_mode output size incl. PyTorch's 'last window starts inside' correction."""
    o = -(-(padded - k) // s) + 1
    if (o - 1) * s >= padded:
        o -= 1
    return o


def _vmem_bytes(shape, itemsize):
    """Approximate VMEM footprint of an array, honouring (sublane, lane) tiling."""
    sub = max(8, 32 // itemsize)          # f32 -> 8 sublanes, bf16 -> 16, int8 -> 32
    n = _round_up(shape[-2], sub) * _round_up(shape[-1], LANE)
    for d in shape[:-2]:
        n *= d
    return n * itemsize


# --------------------------------------------------------------------- Pallas kernel
def _maxpool_kernel(x_ref, o_ref, *scratch, ksize, strides, osize, zero_size,
                    copy_size, copy_off, pad_value, need_neg_fill, need_zero_fill,
                    t_stage, h_stage, w_stage):
    """x_ref : (bt_in, H, W, tc) raw (un-padded) input block, channels on lanes.
    o_ref : (bt, Ho, Wo, tc) output block.
    scratch[0] : padded block (Tscr, Hscr, Wscr, tc); then optional T / H stage tmps."""
    kt, kh, kw = ksize
    st, sh, sw = strides
    To, Ho, Wo = osize

    it_s = iter(scratch)
    pad_ref = next(it_s)
    ttmp_ref = next(it_s) if t_stage else None
    htmp_ref = next(it_s) if h_stage else None

    # ---- build the padded block in VMEM (zero = TF-SAME, pad_value = ceil overflow) --
    if need_neg_fill:
        pad_ref[...] = jnp.full(pad_ref.shape, pad_value, pad_ref.dtype)
    if need_zero_fill:
        tz, hz, wz = zero_size
        pad_ref[0:tz, 0:hz, 0:wz, :] = jnp.zeros(
            (tz, hz, wz, pad_ref.shape[3]), pad_ref.dtype)
    tcp, hcp, wcp = copy_size
    t0, h0, w0 = copy_off
    pad_ref[t0:t0 + tcp, h0:h0 + hcp, w0:w0 + wcp, :] = x_ref[0:tcp, 0:hcp, 0:wcp, :]

    def tap(i, n, s):
        return pl.ds(i, n, stride=s) if s > 1 else pl.ds(i, n)

    # ---- separable max: T and H are outer dims (address-only strided slices), the ----
    # ---- strided sublane reads only happen in the last (smallest) W stage.        ----
    src = pad_ref
    if t_stage:
        acc = src[tap(0, To, st), :, :, :]
        for i in range(1, kt):
            acc = jnp.maximum(acc, src[tap(i, To, st), :, :, :])
        ttmp_ref[...] = acc
        src = ttmp_ref
    if h_stage:
        acc = src[:, tap(0, Ho, sh), :, :]
        for i in range(1, kh):
            acc = jnp.maximum(acc, src[:, tap(i, Ho, sh), :, :])
        htmp_ref[...] = acc
        src = htmp_ref
    if w_stage:
        acc = src[:, :, tap(0, Wo, sw), :]
        for i in range(1, kw):
            acc = jnp.maximum(acc, src[:, :, tap(i, Wo, sw), :])
        o_ref[...] = acc
    else:
        o_ref[...] = src[...]


# ----------------------------------------------------------------------- module glue
def maxpool3d_tf_pallas(x, kernel_size, stride):
    """MaxPool3dTFPadding.forward for x in NCDHW layout (TF-SAME pad + ceil-mode pool)."""
    kt, kh, kw = kernel_size
    st, sh, sw = stride
    N, C, T, H, W = x.shape
    dtype = x.dtype
    itemsize = jnp.dtype(dtype).itemsize

    pads = _same_pads(kernel_size, stride)                     # ((t0,t1),(h0,h1),(w0,w1))
    padded = tuple(d + p0 + p1 for d, (p0, p1) in zip((T, H, W), pads))
    To, Ho, Wo = (_ceil_out(p, k, s)
                  for p, k, s in zip(padded, kernel_size, stride))
    exts = tuple((o - 1) * s + k
                 for o, k, s in zip((To, Ho, Wo), kernel_size, stride))

    # ---- single relayout pass in: channels-last with N folded into the lane axis ----
    NC = N * C
    xl = jnp.transpose(x, (2, 3, 4, 0, 1)).reshape(T, H, W, NC)

    if NC % LANE == 0:
        tc = LANE
    elif NC <= 4 * LANE:
        tc = NC                       # one full-width tile (legal: equals the array dim)
    else:
        tc = LANE                     # boundary lane block is masked by Pallas
    nc_tiles = -(-NC // tc)

    # ---- T tiling: exact with Blocked specs whenever kt == 1 (no pad / no overlap) ----
    t_tileable = (kt == 1)
    t_candidates = [d for d in range(To, 0, -1) if To % d == 0] if t_tileable else [To]

    try:
        info = pltpu.get_tpu_info()
        vmem_cap = int(getattr(info, "vmem_capacity_bytes", 0)) or (64 << 20)
    except Exception:  # pragma: no cover - defensive
        vmem_cap = 64 << 20
    budget = vmem_cap // 2

    t_stage = (kt > 1 or st > 1)
    h_stage = (kh > 1 or sh > 1)
    w_stage = (kw > 1 or sw > 1)

    def footprint(bt):
        bt_in = bt * st if t_tileable else T
        tscr = (bt - 1) * st + kt if t_tileable else exts[0]
        fp = 2 * _vmem_bytes((bt_in, H, W, tc), itemsize)          # double-buffered in
        fp += 2 * _vmem_bytes((bt, Ho, Wo, tc), itemsize)          # double-buffered out
        fp += _vmem_bytes((tscr, exts[1], exts[2], tc), itemsize)  # padded scratch
        if t_stage:
            fp += _vmem_bytes((bt, exts[1], exts[2], tc), itemsize)
        if h_stage:
            fp += _vmem_bytes((bt, Ho, exts[2], tc), itemsize)
        return fp

    bt = next((c for c in t_candidates if footprint(c) <= budget), t_candidates[-1])
    # Split T further so the grid has enough steps to pipeline DMA against compute and
    # to shard across TensorCores on v7x megacore.
    MIN_STEPS = 8
    if t_tileable:
        i = t_candidates.index(bt)
        while nc_tiles * (To // bt) < MIN_STEPS and i + 1 < len(t_candidates):
            i += 1
            bt = t_candidates[i]
    t_tiles = To // bt
    bt_in = bt * st if t_tileable else T
    tscr = (bt - 1) * st + kt if t_tileable else exts[0]
    scr_spatial = (tscr, exts[1], exts[2])

    # zero (TF-SAME) region, raw-data copy region and its offset inside the scratch
    if t_tileable:
        zero_t, copy_t, off_t = tscr, tscr, 0
    else:
        zero_t, copy_t, off_t = padded[0], T, pads[0][0]
    zero_size = (zero_t, padded[1], padded[2])
    copy_size = (copy_t, H, W)
    copy_off = (off_t, pads[1][0], pads[2][0])
    need_neg_fill = zero_size != scr_spatial
    need_zero_fill = (copy_size != zero_size) or (copy_off != (0, 0, 0))

    if jnp.issubdtype(dtype, jnp.floating):
        pad_value = float("-inf")
    else:
        pad_value = int(jnp.iinfo(dtype).min)

    scratch_shapes = [pltpu.VMEM((*scr_spatial, tc), dtype)]
    if t_stage:
        scratch_shapes.append(pltpu.VMEM((bt, exts[1], exts[2], tc), dtype))
    if h_stage:
        scratch_shapes.append(pltpu.VMEM((bt, Ho, exts[2], tc), dtype))

    kernel = functools.partial(
        _maxpool_kernel,
        ksize=kernel_size, strides=stride, osize=(bt, Ho, Wo),
        zero_size=zero_size, copy_size=copy_size, copy_off=copy_off,
        pad_value=pad_value, need_neg_fill=need_neg_fill,
        need_zero_fill=need_zero_fill,
        t_stage=t_stage, h_stage=h_stage, w_stage=w_stage)

    vmem_limit = int(min(vmem_cap, max(32 << 20, footprint(bt) + (16 << 20))))

    out_l = pl.pallas_call(
        kernel,
        out_shape=jax.ShapeDtypeStruct((To, Ho, Wo, NC), dtype),
        grid=(nc_tiles, t_tiles),
        in_specs=[pl.BlockSpec((bt_in, H, W, tc), lambda c, t: (t, 0, 0, c))],
        out_specs=pl.BlockSpec((bt, Ho, Wo, tc), lambda c, t: (t, 0, 0, c)),
        scratch_shapes=scratch_shapes,
        compiler_params=pltpu.CompilerParams(
            dimension_semantics=("parallel", "parallel"),
            vmem_limit_bytes=vmem_limit),
    )(xl)

    # ---- single relayout pass out: back to NCDHW ----
    return jnp.transpose(out_l.reshape(To, Ho, Wo, N, C), (3, 4, 0, 1, 2))


# -------------------------------------------------------------------- XLA reference
def maxpool3d_tf_reference(x, kernel_size, stride):
    """Pure-XLA lowering of the same module, for correctness checking."""
    kt, kh, kw = kernel_size
    st, sh, sw = stride
    pads = _same_pads(kernel_size, stride)
    xp = jnp.pad(x, ((0, 0), (0, 0)) + pads)          # SAME zeros participate in the max
    Tp, Hp, Wp = xp.shape[2:]
    To = _ceil_out(Tp, kt, st)
    Ho = _ceil_out(Hp, kh, sh)
    Wo = _ceil_out(Wp, kw, sw)
    ex = ((To - 1) * st + kt - Tp, (Ho - 1) * sh + kh - Hp, (Wo - 1) * sw + kw - Wp)
    return jax.lax.reduce_window(
        xp, -jnp.inf, jax.lax.max,
        window_dimensions=(1, 1, kt, kh, kw),
        window_strides=(1, 1, st, sh, sw),
        padding=((0, 0), (0, 0), (0, ex[0]), (0, ex[1]), (0, ex[2])))


# ----------------------------------------------------------------------------- main
if __name__ == "__main__":
    key = jax.random.PRNGKey(0)
    keys = jax.random.split(key, 3)

    # (shape NCDHW, kernel_size, stride) — the three pooling configs used by I3D.
    configs = [
        ((2, 64, 8, 16, 16), (1, 3, 3), (1, 2, 2)),
        ((1, 128, 9, 15, 15), (3, 3, 3), (2, 2, 2)),
        ((1, 32, 6, 10, 10), (3, 3, 3), (1, 1, 1)),
    ]

    for kk, (shape, ksize, strd) in zip(keys, configs):
        x = jax.random.normal(kk, shape, jnp.float32)
        fn = jax.jit(functools.partial(maxpool3d_tf_pallas,
                                       kernel_size=ksize, stride=strd))
        out = jax.block_until_ready(fn(x))
        ref = jax.block_until_ready(maxpool3d_tf_reference(x, ksize, strd))
        assert out.shape == ref.shape, (out.shape, ref.shape)
        assert bool(jnp.all(jnp.isfinite(out))), "non-finite output"
        assert bool(jnp.all(out == ref)), float(jnp.max(jnp.abs(out - ref)))

    print("KERNEL_OK")
</pallas_src>

<mosaic_0001>
module attributes {stable_mosaic.version = 11 : i64} {
  func.func @_maxpool_kernel(%arg0: i32, %arg1: i32, %arg2: memref<1x16x16x128xf32, #tpu.memory_space<vmem>>, %arg3: memref<1x8x8x128xf32, #tpu.memory_space<vmem>>, %arg4: memref<1x17x17x128xf32, #tpu.memory_space<vmem>>, %arg5: memref<1x8x17x128xf32, #tpu.memory_space<vmem>>) attributes {dimension_semantics = [#tpu.dimension_semantics<parallel>, #tpu.dimension_semantics<parallel>], iteration_bounds = array<i64: 1, 8>, scalar_prefetch = 0 : i64, scratch_operands = 2 : i64, tpu.core_type = #tpu.core_type<tc>, window_params = [{transform_indices = @transform_0, window_bounds = array<i64: 1, 16, 16, 128>}, {transform_indices = @transform_1, window_bounds = array<i64: 1, 8, 8, 128>}]} {
    %cst = arith.constant 0.000000e+00 : f32
    %0 = vector.broadcast %cst : f32 to vector<1x17x17x128xf32>
    %c0 = arith.constant 0 : index
    %c0_0 = arith.constant 0 : index
    %c0_1 = arith.constant 0 : index
    %c0_2 = arith.constant 0 : index
    %1 = vector.load %arg4[%c0, %c0_0, %c0_1, %c0_2] : memref<1x17x17x128xf32, #tpu.memory_space<vmem>>, vector<1x17x17x128xf32>
    tpu.vector_store %arg4[%c0, %c0_0, %c0_1, %c0_2], %0 {strides = array<i32>} : memref<1x17x17x128xf32, #tpu.memory_space<vmem>>, vector<1x17x17x128xf32>,
    %c0_3 = arith.constant 0 : index
    %c0_4 = arith.constant 0 : index
    %c0_5 = arith.constant 0 : index
    %c0_6 = arith.constant 0 : index
    %2 = vector.load %arg2[%c0_3, %c0_4, %c0_5, %c0_6] : memref<1x16x16x128xf32, #tpu.memory_space<vmem>>, vector<1x16x16x128xf32>
    %c0_7 = arith.constant 0 : index
    %c0_8 = arith.constant 0 : index
    %c0_9 = arith.constant 0 : index
    %c0_10 = arith.constant 0 : index
    %3 = vector.load %arg4[%c0_7, %c0_8, %c0_9, %c0_10] : memref<1x17x17x128xf32, #tpu.memory_space<vmem>>, vector<1x16x16x128xf32>
    tpu.vector_store %arg4[%c0_7, %c0_8, %c0_9, %c0_10], %2 {strides = array<i32>} : memref<1x17x17x128xf32, #tpu.memory_space<vmem>>, vector<1x16x16x128xf32>,
    %c0_11 = arith.constant 0 : index
    %c0_12 = arith.constant 0 : index
    %c0_13 = arith.constant 0 : index
    %c0_14 = arith.constant 0 : index
    %4 = tpu.strided_load %arg4[%c0_11, %c0_12, %c0_13, %c0_14] {strides = array<i32: 1, 2, 1, 1>} : memref<1x17x17x128xf32, #tpu.memory_space<vmem>>, vector<1x8x17x128xf32>
    %c0_15 = arith.constant 0 : index
    %c1 = arith.constant 1 : index
    %c0_16 = arith.constant 0 : index
    %c0_17 = arith.constant 0 : index
    %5 = tpu.strided_load %arg4[%c0_15, %c1, %c0_16, %c0_17] {strides = array<i32: 1, 2, 1, 1>} : memref<1x17x17x128xf32, #tpu.memory_space<vmem>>, vector<1x8x17x128xf32>
    %6 = arith.maximumf %4, %5 : vector<1x8x17x128xf32>
    %c0_18 = arith.constant 0 : index
    %c2 = arith.constant 2 : index
    %c0_19 = arith.constant 0 : index
    %c0_20 = arith.constant 0 : index
    %7 = tpu.strided_load %arg4[%c0_18, %c2, %c0_19, %c0_20] {strides = array<i32: 1, 2, 1, 1>} : memref<1x17x17x128xf32, #tpu.memory_space<vmem>>, vector<1x8x17x128xf32>
    %8 = arith.maximumf %6, %7 : vector<1x8x17x128xf32>
    %c0_21 = arith.constant 0 : index
    %c0_22 = arith.constant 0 : index
    %c0_23 = arith.constant 0 : index
    %c0_24 = arith.constant 0 : index
    %9 = vector.load %arg5[%c0_21, %c0_22, %c0_23, %c0_24] : memref<1x8x17x128xf32, #tpu.memory_space<vmem>>, vector<1x8x17x128xf32>
    tpu.vector_store %arg5[%c0_21, %c0_22, %c0_23, %c0_24], %8 {strides = array<i32>} : memref<1x8x17x128xf32, #tpu.memory_space<vmem>>, vector<1x8x17x128xf32>,
    %c0_25 = arith.constant 0 : index
    %c0_26 = arith.constant 0 : index
    %c0_27 = arith.constant 0 : index
    %c0_28 = arith.constant 0 : index
    %10 = tpu.strided_load %arg5[%c0_25, %c0_26, %c0_27, %c0_28] {strides = array<i32: 1, 1, 2, 1>} : memref<1x8x17x128xf32, #tpu.memory_space<vmem>>, vector<1x8x8x128xf32>
    %c0_29 = arith.constant 0 : index
    %c0_30 = arith.constant 0 : index
    %c1_31 = arith.constant 1 : index
    %c0_32 = arith.constant 0 : index
    %11 = tpu.strided_load %arg5[%c0_29, %c0_30, %c1_31, %c0_32] {strides = array<i32: 1, 1, 2, 1>} : memref<1x8x17x128xf32, #tpu.memory_space<vmem>>, vector<1x8x8x128xf32>
    %12 = arith.maximumf %10, %11 : vector<1x8x8x128xf32>
    %c0_33 = arith.constant 0 : index
    %c0_34 = arith.constant 0 : index
    %c2_35 = arith.constant 2 : index
    %c0_36 = arith.constant 0 : index
    %13 = tpu.strided_load %arg5[%c0_33, %c0_34, %c2_35, %c0_36] {strides = array<i32: 1, 1, 2, 1>} : memref<1x8x17x128xf32, #tpu.memory_space<vmem>>, vector<1x8x8x128xf32>
    %14 = arith.maximumf %12, %13 : vector<1x8x8x128xf32>
    %c0_37 = arith.constant 0 : index
    %c0_38 = arith.constant 0 : index
    %c0_39 = arith.constant 0 : index
    %c0_40 = arith.constant 0 : index
    %15 = vector.load %arg3[%c0_37, %c0_38, %c0_39, %c0_40] : memref<1x8x8x128xf32, #tpu.memory_space<vmem>>, vector<1x8x8x128xf32>
    tpu.vector_store %arg3[%c0_37, %c0_38, %c0_39, %c0_40], %14 {strides = array<i32>} : memref<1x8x8x128xf32, #tpu.memory_space<vmem>>, vector<1x8x8x128xf32>,
    return
  }
  func.func @transform_0(%arg0: i32, %arg1: i32) -> (i32, i32, i32, i32) {
    %c0_i32 = arith.constant 0 : i32
    %c0_i32_0 = arith.constant 0 : i32
    %c0_i32_1 = arith.constant 0 : i32
    return %arg1, %c0_i32, %c0_i32_0, %arg0 : i32, i32, i32, i32
  }
  func.func @transform_1(%arg0: i32, %arg1: i32) -> (i32, i32, i32, i32) {
    %c0_i32 = arith.constant 0 : i32
    %c0_i32_0 = arith.constant 0 : i32
    %c0_i32_1 = arith.constant 0 : i32
    return %arg1, %c0_i32, %c0_i32_0, %arg0 : i32, i32, i32, i32
  }
}

</mosaic_0001>

<llo_original>
// kernel: maxpool3d_tf_pallas.1
$region0: #{maxpool3d_tf_pallas.1}
  #allocation0 [shape = 'u32[]', space=smem, size = 0x4, offset = 0x4, fixed_abs, tag = 'smem constant byte address 0x4 - core index']
  #allocation1 [shape = 'u32[144,128]{1,0:T(1,128)}', space=vmem, size = 0x12000, scoped, tag = 'internal scratch']
  #allocation2 [shape = 'f32[1,17,17,128]{3,2,1,0:T(8,128)}', space=vmem, size = 0x33000, scoped, tag = 'scratch operand']
  #allocation3 [shape = 'f32[1,8,17,128]{3,2,1,0:T(8,128)}', space=vmem, size = 0x18000, scoped, tag = 'scratch operand']
  %s0 = inlined_call_operand.vmem [shape: f32[8,16,16,128], index: 0, kind: input, shape index: {}]
  %s1 = inlined_call_operand.vmem [shape: f32[8,8,8,128], index: 1, kind: output, shape index: {}]
  %s2 = sld [smem:[#allocation0]]
  $region37: #{maxpool3d_tf_pallas.1} parent=0
    _
  %s4 = ssub.s32 1, %s2
  %s5 = scalar_select 0, %s4, %s2
  loop: start=0, step=1, limit=10
  $region2: #{maxpool3d_tf_pallas.1} parent=0 // loop_pre_header
    _
  $region3: #{maxpool3d_tf_pallas.1} parent=0 // loop_header
    %s7 = sphi 0, %s11
    %p8 = scmp.ge.s32.totalorder %s7, 10
    %s14 = sphi 0, %s26
    %s15 = sphi 0, %s22
    %s16 = sphi 0, %s14
    %s17 = sphi 0, %s15
    %s18 = sphi 0, %s16
    %s19 = sphi 0, %s17
    %s31 = sphi 0, %s33
    %s34 = sphi 0, %s31
    %s35 = sphi 0, %s34
    %s51 = sphi 0, %s35
    %s59 = sphi 0, %s61
    %s62 = sphi 0, %s59
    %s63 = sphi 0, %s62
    %s79 = sphi 0, %s63
  $region4: #{maxpool3d_tf_pallas.1} parent=0 // loop_header_branch
    %10 = sbr.rel (%p8) target = $region8
  $region5: #{maxpool3d_tf_pallas.1} parent=0 // loop_body
    %s12 = ssub.s32 %s7, 1
    %s13 = ssub.s32 %s7, 2
    %s20 = sadd.s32 1, %s15
    %p21 = scmp.ge.s32.totalorder %s20, 8
    %s22 = scalar_select %p21, 0, %s20
    %s23 = sadd.s32 1, %s14
    %s24 = scalar_select %p21, %s23, %s14
    %p25 = scmp.ge.s32.totalorder %s24, 1
    %s26 = scalar_select %p25, 0, %s24
    %s27 = ssub.s32 %s15, %s22
    %s28 = ssub.s32 %s14, %s26
    %s29 = sor.u32 %s27, %s28
    %p30 = scmp.eq.s32.totalorder %s29, 0
    %s32 = sadd.s32 %s31, 1
    %s33 = scalar_select %p30, %s31, %s32
    %p36 = pneg %p30
    %p37 = scmp.eq.s32.totalorder %s7, 7
    %p38 = por %p36, %p37
    %p39 = scmp.ne.s32.totalorder %s31, %s34
    %p40 = scmp.eq.s32.totalorder %s7, 0
    %p41 = por %p39, %p40
    %p42 = scmp.ne.s32.totalorder %s31, %s34
    %p43 = scmp.eq.s32.totalorder %s12, 7
    %p44 = por %p42, %p43
    %p45 = scmp.ne.s32.totalorder %s34, %s35
    %p46 = scmp.eq.s32.totalorder %s12, 0
    %p47 = por %p45, %p46
    %p48 = scmp.ne.s32.totalorder %s34, %s35
    %p49 = scmp.eq.s32.totalorder %s13, 7
    %p50 = por %p48, %p49
    %p52 = scmp.ne.s32.totalorder %s35, %s51
    %p53 = scmp.eq.s32.totalorder %s13, 0
    %p54 = por %p52, %p53
    %s55 = ssub.s32 %s15, %s22
    %s56 = ssub.s32 %s14, %s26
    %s57 = sor.u32 %s55, %s56
    %p58 = scmp.eq.s32.totalorder %s57, 0
    %s60 = sadd.s32 %s59, 1
    %s61 = scalar_select %p58, %s59, %s60
    %p64 = pneg %p58
    %p65 = scmp.eq.s32.totalorder %s7, 7
    %p66 = por %p64, %p65
    %p67 = scmp.ne.s32.totalorder %s59, %s62
    %p68 = scmp.eq.s32.totalorder %s7, 0
    %p69 = por %p67, %p68
    %p70 = scmp.ne.s32.totalorder %s59, %s62
    %p71 = scmp.eq.s32.totalorder %s12, 7
    %p72 = por %p70, %p71
    %p73 = scmp.ne.s32.totalorder %s62, %s63
    %p74 = scmp.eq.s32.totalorder %s12, 0
    %p75 = por %p73, %p74
    %p76 = scmp.ne.s32.totalorder %s62, %s63
    %p77 = scmp.eq.s32.totalorder %s13, 7
    %p78 = por %p76, %p77
    %p80 = scmp.ne.s32.totalorder %s63, %s79
    %p81 = scmp.eq.s32.totalorder %s13, 0
    %p82 = por %p80, %p81
    %p83 = scmp.le.s32.totalorder 1, %s7
    %p84 = scmp.lt.s32.totalorder %s7, 9
    %p85 = pnand %p83, %p84
    %p86 = pneg %p85
    // Predicated region
    $region9: #{maxpool3d_tf_pallas.1} parent=5 // pred_check
      _
    $region10: #{maxpool3d_tf_pallas.1} parent=5 // pred_check_branch
      %88 = sbr.rel (%p85) target = $region12
    $region11: #{maxpool3d_tf_pallas.1} parent=5 // pred_region
      %s89 = ssub.s32 %s7, 1
    $region12: #{maxpool3d_tf_pallas.1} parent=5 // pred_fallthru
      _
    %p90 = scmp.lt.s32.totalorder %s7, 8
    // Predicated region
    $region13: #{maxpool3d_tf_pallas.1} parent=5 // pred_check
      %p91 = pneg %p90
    $region14: #{maxpool3d_tf_pallas.1} parent=5 // pred_check_branch
      %93 = sbr.rel (%p91) target = $region16
    $region15: #{maxpool3d_tf_pallas.1} parent=5 // pred_region
      // Predicated region
      $region17: #{maxpool3d_tf_pallas.1} parent=15 // pred_check
        %p94 = pneg %p41
      $region18: #{maxpool3d_tf_pallas.1} parent=15 // pred_check_branch
        %96 = sbr.rel (%p94) target = $region20
      $region19: #{maxpool3d_tf_pallas.1} parent=15 // pred_region
        %p97 = scmp.lt.s32.totalorder %s15, 7
        %s98 = scalar_select %p97, %s15, 7
        %p99 = scmp.lt.s32.totalorder %s14, 0
        %s100 = scalar_select %p99, %s14, 0
        %s101 = smul.addr %s98, 32
        %s102 = sadd.s32 %s100, %s101
        %s103 = smul.addr %s102, 8
        %s104 = scalar_lea.vmem %s0, %s103
      $region20: #{maxpool3d_tf_pallas.1} parent=15 // pred_fallthru
        _
    $region16: #{maxpool3d_tf_pallas.1} parent=5 // pred_fallthru
      _
    %p105 = scmp.le.s32.totalorder 1, %s7
    %p106 = scmp.lt.s32.totalorder %s7, 9
    %p107 = pnand %p105, %p106
    %p108 = pneg %p107
    // Predicated region
    $region21: #{maxpool3d_tf_pallas.1} parent=5 // pred_check
      _
    $region22: #{maxpool3d_tf_pallas.1} parent=5 // pred_check_branch
      %110 = sbr.rel (%p107) target = $region24
    $region23: #{maxpool3d_tf_pallas.1} parent=5 // pred_region
      %s111 = ssub.s32 %s7, 1
      %p112 = scmp.lt.s32.totalorder %s17, 7
      %s113 = scalar_select %p112, %s17, 7
      %p114 = scmp.lt.s32.totalorder %s16, 0
      %s115 = scalar_select %p114, %s16, 0
      %s116 = smul.addr %s113, 32
      %s117 = sadd.s32 %s115, %s116
      %s118 = smul.addr %s117, 8
      %s119 = scalar_lea.vmem %s0, %s118
      %p120 = pneg %p47
      %p121 = pneg %p44
      %p122 = pneg %p75
      %p123 = pneg %p72
      %p124 = scmp.lt.s32.totalorder %s17, 7
      %s125 = scalar_select %p124, %s17, 7
      %p126 = scmp.lt.s32.totalorder %s16, 0
      %s127 = scalar_select %p126, %s16, 0
      %s128 = smul.addr %s125, 8
      %s129 = sadd.s32 %s127, %s128
      %s130 = smul.addr %s129, 8
      %s131 = scalar_lea.vmem %s1, %s130
      %p132 = scmp.lt.s32.totalorder %s17, 7
      %s133 = scalar_select %p132, %s17, 7
      %p134 = scmp.lt.s32.totalorder %s16, 0
      %s135 = scalar_select %p134, %s16, 0
      %s136 = smul.addr %s133, 32
      %s137 = sadd.s32 %s135, %s136
      %s138 = smul.addr %s137, 8
      %s139 = scalar_lea.vmem %s0, %s138
      %p140 = scmp.lt.s32.totalorder %s17, 7
      %s141 = scalar_select %p140, %s17, 7
      %p142 = scmp.lt.s32.totalorder %s16, 0
      %s143 = scalar_select %p142, %s16, 0
      %s144 = smul.addr %s141, 8
      %s145 = sadd.s32 %s143, %s144
      %s146 = smul.addr %s145, 8
      %s147 = scalar_lea.vmem %s1, %s146
      %148 = vst [vmem:[#allocation2] sm:$0xff] 0.0
      %149 = vst [vmem:[#allocation2 + $0x8] sm:$0xff] 0.0
      %150 = vst [vmem:[#allocation2 + $0x10] sm:$0x1] 0.0
      %151 = vst [vmem:[#allocation2 + $0x18] sm:$0xff] 0.0
      %152 = vst [vmem:[#allocation2 + $0x20] sm:$0xff] 0.0
      %153 = vst [vmem:[#allocation2 + $0x28] sm:$0x1] 0.0
      %154 = vst [vmem:[#allocation2 + $0x30] sm:$0xff] 0.0
      %155 = vst [vmem:[#allocation2 + $0x38] sm:$0xff] 0.0
      %156 = vst [vmem:[#allocation2 + $0x40] sm:$0x1] 0.0
      %157 = vst [vmem:[#allocation2 + $0x48] sm:$0xff] 0.0
      %158 = vst [vmem:[#allocation2 + $0x50] sm:$0xff] 0.0
      %159 = vst [vmem:[#allocation2 + $0x58] sm:$0x1] 0.0
      %160 = vst [vmem:[#allocation2 + $0x60] sm:$0xff] 0.0
      %161 = vst [vmem:[#allocation2 + $0x68] sm:$0xff] 0.0
      %162 = vst [vmem:[#allocation2 + $0x70] sm:$0x1] 0.0
      %163 = vst [vmem:[#allocation2 + $0x78] sm:$0xff] 0.0
      %164 = vst [vmem:[#allocation2 + $0x80] sm:$0xff] 0.0
      %165 = vst [vmem:[#allocation2 + $0x88] sm:$0x1] 0.0
      %166 = vst [vmem:[#allocation2 + $0x90] sm:$0xff] 0.0
      %167 = vst [vmem:[#allocation2 + $0x98] sm:$0xff] 0.0
      %168 = vst [vmem:[#allocation2 + $0xa0] sm:$0x1] 0.0
      %169 = vst [vmem:[#allocation2 + $0xa8] sm:$0xff] 0.0
      %170 = vst [vmem:[#allocation2 + $0xb0] sm:$0xff] 0.0
      %171 = vst [vmem:[#allocation2 + $0xb8] sm:$0x1] 0.0
      %172 = vst [vmem:[#allocation2 + $0xc0] sm:$0xff] 0.0
      %173 = vst [vmem:[#allocation2 + $0xc8] sm:$0xff] 0.0
      %174 = vst [vmem:[#allocation2 + $0xd0] sm:$0x1] 0.0
      %175 = vst [vmem:[#allocation2 + $0xd8] sm:$0xff] 0.0
      %176 = vst [vmem:[#allocation2 + $0xe0] sm:$0xff] 0.0
      %177 = vst [vmem:[#allocation2 + $0xe8] sm:$0x1] 0.0
      %178 = vst [vmem:[#allocation2 + $0xf0] sm:$0xff] 0.0
      %179 = vst [vmem:[#allocation2 + $0xf8] sm:$0xff] 0.0
      %180 = vst [vmem:[#allocation2 + $0x100] sm:$0x1] 0.0
      %181 = vst [vmem:[#allocation2 + $0x108] sm:$0xff] 0.0
      %182 = vst [vmem:[#allocation2 + $0x110] sm:$0xff] 0.0
      %183 = vst [vmem:[#allocation2 + $0x118] sm:$0x1] 0.0
      %184 = vst [vmem:[#allocation2 + $0x120] sm:$0xff] 0.0
      %185 = vst [vmem:[#allocation2 + $0x128] sm:$0xff] 0.0
      %186 = vst [vmem:[#allocation2 + $0x130] sm:$0x1] 0.0
      %187 = vst [vmem:[#allocation2 + $0x138] sm:$0xff] 0.0
      %188 = vst [vmem:[#allocation2 + $0x140] sm:$0xff] 0.0
      %189 = vst [vmem:[#allocation2 + $0x148] sm:$0x1] 0.0
      %190 = vst [vmem:[#allocation2 + $0x150] sm:$0xff] 0.0
      %191 = vst [vmem:[#allocation2 + $0x158] sm:$0xff] 0.0
      %192 = vst [vmem:[#allocation2 + $0x160] sm:$0x1] 0.0
      %193 = vst [vmem:[#allocation2 + $0x168] sm:$0xff] 0.0
      %194 = vst [vmem:[#allocation2 + $0x170] sm:$0xff] 0.0
      %195 = vst [vmem:[#allocation2 + $0x178] sm:$0x1] 0.0
      %196 = vst [vmem:[#allocation2 + $0x180] sm:$0xff] 0.0
      %197 = vst [vmem:[#allocation2 + $0x188] sm:$0xff] 0.0
      %198 = vst [vmem:[#allocation2 + $0x190] sm:$0x1] 0.0
      %v199 = vld [vmem:[%s139] sm:$0xff]
      %v200 = vld [vmem:[%s139 + $0x8] sm:$0xff]
      %v201 = vld [vmem:[%s139 + $0x10] sm:$0xff]
      %v202 = vld [vmem:[%s139 + $0x18] sm:$0xff]
      %v203 = vld [vmem:[%s139 + $0x20] sm:$0xff]
      %v204 = vld [vmem:[%s139 + $0x28] sm:$0xff]
      %v205 = vld [vmem:[%s139 + $0x30] sm:$0xff]
      %v206 = vld [vmem:[%s139 + $0x38] sm:$0xff]
      %v207 = vld [vmem:[%s139 + $0x40] sm:$0xff]
      %v208 = vld [vmem:[%s139 + $0x48] sm:$0xff]
      %v209 = vld [vmem:[%s139 + $0x50] sm:$0xff]
      %v210 = vld [vmem:[%s139 + $0x58] sm:$0xff]
      %v211 = vld [vmem:[%s139 + $0x60] sm:$0xff]
      %v212 = vld [vmem:[%s139 + $0x68] sm:$0xff]
      %v213 = vld [vmem:[%s139 + $0x70] sm:$0xff]
      %v214 = vld [vmem:[%s139 + $0x78] sm:$0xff]
      %v215 = vld [vmem:[%s139 + $0x80] sm:$0xff]
      %v216 = vld [vmem:[%s139 + $0x88] sm:$0xff]
      %v217 = vld [vmem:[%s139 + $0x90] sm:$0xff]
      %v218 = vld [vmem:[%s139 + $0x98] sm:$0xff]
      %v219 = vld [vmem:[%s139 + $0xa0] sm:$0xff]
      %v220 = vld [vmem:[%s139 + $0xa8] sm:$0xff]
      %v221 = vld [vmem:[%s139 + $0xb0] sm:$0xff]
      %v222 = vld [vmem:[%s139 + $0xb8] sm:$0xff]
      %v223 = vld [vmem:[%s139 + $0xc0] sm:$0xff]
      %v224 = vld [vmem:[%s139 + $0xc8] sm:$0xff]
      %v225 = vld [vmem:[%s139 + $0xd0] sm:$0xff]
      %v226 = vld [vmem:[%s139 + $0xd8] sm:$0xff]
      %v227 = vld [vmem:[%s139 + $0xe0] sm:$0xff]
      %v228 = vld [vmem:[%s139 + $0xe8] sm:$0xff]
      %v229 = vld [vmem:[%s139 + $0xf0] sm:$0xff]
      %v230 = vld [vmem:[%s139 + $0xf8] sm:$0xff]
      %231 = vst [vmem:[#allocation2] sm:$0xff] %v199
      %232 = vst [vmem:[#allocation2 + $0x8] sm:$0xff] %v200
      %233 = vst [vmem:[#allocation2 + $0x18] sm:$0xff] %v201
      %234 = vst [vmem:[#allocation2 + $0x20] sm:$0xff] %v202
      %235 = vst [vmem:[#allocation2 + $0x30] sm:$0xff] %v203
      %236 = vst [vmem:[#allocation2 + $0x38] sm:$0xff] %v204
      %237 = vst [vmem:[#allocation2 + $0x48] sm:$0xff] %v205
      %238 = vst [vmem:[#allocation2 + $0x50] sm:$0xff] %v206
      %239 = vst [vmem:[#allocation2 + $0x60] sm:$0xff] %v207
      %240 = vst [vmem:[#allocation2 + $0x68] sm:$0xff] %v208
      %241 = vst [vmem:[#allocation2 + $0x78] sm:$0xff] %v209
      %242 = vst [vmem:[#allocation2 + $0x80] sm:$0xff] %v210
      %243 = vst [vmem:[#allocation2 + $0x90] sm:$0xff] %v211
      %244 = vst [vmem:[#allocation2 + $0x98] sm:$0xff] %v212
      %245 = vst [vmem:[#allocation2 + $0xa8] sm:$0xff] %v213
      %246 = vst [vmem:[#allocation2 + $0xb0] sm:$0xff] %v214
      %247 = vst [vmem:[#allocation2 + $0xc0] sm:$0xff] %v215
      %248 = vst [vmem:[#allocation2 + $0xc8] sm:$0xff] %v216
      %249 = vst [vmem:[#allocation2 + $0xd8] sm:$0xff] %v217
      %250 = vst [vmem:[#allocation2 + $0xe0] sm:$0xff] %v218
      %251 = vst [vmem:[#allocation2 + $0xf0] sm:$0xff] %v219
      %252 = vst [vmem:[#allocation2 + $0xf8] sm:$0xff] %v220
      %253 = vst [vmem:[#allocation2 + $0x108] sm:$0xff] %v221
      %254 = vst [vmem:[#allocation2 + $0x110] sm:$0xff] %v222
      %255 = vst [vmem:[#allocation2 + $0x120] sm:$0xff] %v223
      %256 = vst [vmem:[#allocation2 + $0x128] sm:$0xff] %v224
      %257 = vst [vmem:[#allocation2 + $0x138] sm:$0xff] %v225
      %258 = vst [vmem:[#allocation2 + $0x140] sm:$0xff] %v226
      %259 = vst [vmem:[#allocation2 + $0x150] sm:$0xff] %v227
      %260 = vst [vmem:[#allocation2 + $0x158] sm:$0xff] %v228
      %261 = vst [vmem:[#allocation2 + $0x168] sm:$0xff] %v229
      %262 = vst [vmem:[#allocation2 + $0x170] sm:$0xff] %v230
      %v263 = vld [vmem:[#allocation2] sm:$0xff]
      %v264 = vld [vmem:[#allocation2 + $0x8] sm:$0xff]
      %v265 = vld [vmem:[#allocation2 + $0x10] sm:$0x1]
      %v266 = vld [vmem:[#allocation2 + $0x30] sm:$0xff]
      %v267 = vld [vmem:[#allocation2 + $0x38] sm:$0xff]
      %v268 = vld [vmem:[#allocation2 + $0x40] sm:$0x1]
      %v269 = vld [vmem:[#allocation2 + $0x60] sm:$0xff]
      %v270 = vld [vmem:[#allocation2 + $0x68] sm:$0xff]
      %v271 = vld [vmem:[#allocation2 + $0x70] sm:$0x1]
      %v272 = vld [vmem:[#allocation2 + $0x90] sm:$0xff]
      %v273 = vld [vmem:[#allocation2 + $0x98] sm:$0xff]
      %v274 = vld [vmem:[#allocation2 + $0xa0] sm:$0x1]
      %v275 = vld [vmem:[#allocation2 + $0xc0] sm:$0xff]
      %v276 = vld [vmem:[#allocation2 + $0xc8] sm:$0xff]
      %v277 = vld [vmem:[#allocation2 + $0xd0] sm:$0x1]
      %v278 = vld [vmem:[#allocation2 + $0xf0] sm:$0xff]
      %v279 = vld [vmem:[#allocation2 + $0xf8] sm:$0xff]
      %v280 = vld [vmem:[#allocation2 + $0x100] sm:$0x1]
      %v281 = vld [vmem:[#allocation2 + $0x120] sm:$0xff]
      %v282 = vld [vmem:[#allocation2 + $0x128] sm:$0xff]
      %v283 = vld [vmem:[#allocation2 + $0x130] sm:$0x1]
      %v284 = vld [vmem:[#allocation2 + $0x150] sm:$0xff]
      %v285 = vld [vmem:[#allocation2 + $0x158] sm:$0xff]
      %v286 = vld [vmem:[#allocation2 + $0x160] sm:$0x1]
      %s287 = scalar_lea.vmem [#allocation2], 24
      %v288 = vld [vmem:[%s287] sm:$0xff]
      %v289 = vld [vmem:[%s287 + $0x8] sm:$0xff]
      %v290 = vld [vmem:[%s287 + $0x10] sm:$0x1]
      %v291 = vld [vmem:[%s287 + $0x30] sm:$0xff]
      %v292 = vld [vmem:[%s287 + $0x38] sm:$0xff]
      %v293 = vld [vmem:[%s287 + $0x40] sm:$0x1]
      %v294 = vld [vmem:[%s287 + $0x60] sm:$0xff]
      %v295 = vld [vmem:[%s287 + $0x68] sm:$0xff]
      %v296 = vld [vmem:[%s287 + $0x70] sm:$0x1]
      %v297 = vld [vmem:[%s287 + $0x90] sm:$0xff]
      %v298 = vld [vmem:[%s287 + $0x98] sm:$0xff]
      %v299 = vld [vmem:[%s287 + $0xa0] sm:$0x1]
      %v300 = vld [vmem:[%s287 + $0xc0] sm:$0xff]
      %v301 = vld [vmem:[%s287 + $0xc8] sm:$0xff]
      %v302 = vld [vmem:[%s287 + $0xd0] sm:$0x1]
      %v303 = vld [vmem:[%s287 + $0xf0] sm:$0xff]
      %v304 = vld [vmem:[%s287 + $0xf8] sm:$0xff]
      %v305 = vld [vmem:[%s287 + $0x100] sm:$0x1]
      %v306 = vld [vmem:[%s287 + $0x120] sm:$0xff]
      %v307 = vld [vmem:[%s287 + $0x128] sm:$0xff]
      %v308 = vld [vmem:[%s287 + $0x130] sm:$0x1]
      %v309 = vld [vmem:[%s287 + $0x150] sm:$0xff]
      %v310 = vld [vmem:[%s287 + $0x158] sm:$0xff]
      %v311 = vld [vmem:[%s287 + $0x160] sm:$0x1]
      %v312 = vmax.f32 %v263, %v288
      %v313 = vmax.f32 %v264, %v289
      %v314 = vmax.f32 %v265, %v290
      %v315 = vmax.f32 %v266, %v291
      %v316 = vmax.f32 %v267, %v292
      %v317 = vmax.f32 %v268, %v293
      %v318 = vmax.f32 %v269, %v294
      %v319 = vmax.f32 %v270, %v295
      %v320 = vmax.f32 %v271, %v296
      %v321 = vmax.f32 %v272, %v297
      %v322 = vmax.f32 %v273, %v298
      %v323 = vmax.f32 %v274, %v299
      %v324 = vmax.f32 %v275, %v300
      %v325 = vmax.f32 %v276, %v301
      %v326 = vmax.f32 %v277, %v302
      %v327 = vmax.f32 %v278, %v303
      %v328 = vmax.f32 %v279, %v304
      %v329 = vmax.f32 %v280, %v305
      %v330 = vmax.f32 %v281, %v306
      %v331 = vmax.f32 %v282, %v307
      %v332 = vmax.f32 %v283, %v308
      %v333 = vmax.f32 %v284, %v309
      %v334 = vmax.f32 %v285, %v310
      %v335 = vmax.f32 %v286, %v311
      %s336 = scalar_lea.vmem [#allocation2], 48
      %v337 = vld [vmem:[%s336] sm:$0xff]
      %v338 = vld [vmem:[%s336 + $0x8] sm:$0xff]
      %v339 = vld [vmem:[%s336 + $0x10] sm:$0x1]
      %v340 = vld [vmem:[%s336 + $0x30] sm:$0xff]
      %v341 = vld [vmem:[%s336 + $0x38] sm:$0xff]
      %v342 = vld [vmem:[%s336 + $0x40] sm:$0x1]
      %v343 = vld [vmem:[%s336 + $0x60] sm:$0xff]
      %v344 = vld [vmem:[%s336 + $0x68] sm:$0xff]
      %v345 = vld [vmem:[%s336 + $0x70] sm:$0x1]
      %v346 = vld [vmem:[%s336 + $0x90] sm:$0xff]
      %v347 = vld [vmem:[%s336 + $0x98] sm:$0xff]
      %v348 = vld [vmem:[%s336 + $0xa0] sm:$0x1]
      %v349 = vld [vmem:[%s336 + $0xc0] sm:$0xff]
      %v350 = vld [vmem:[%s336 + $0xc8] sm:$0xff]
      %v351 = vld [vmem:[%s336 + $0xd0] sm:$0x1]
      %v352 = vld [vmem:[%s336 + $0xf0] sm:$0xff]
      %v353 = vld [vmem:[%s336 + $0xf8] sm:$0xff]
      %v354 = vld [vmem:[%s336 + $0x100] sm:$0x1]
      %v355 = vld [vmem:[%s336 + $0x120] sm:$0xff]
      %v356 = vld [vmem:[%s336 + $0x128] sm:$0xff]
      %v357 = vld [vmem:[%s336 + $0x130] sm:$0x1]
      %v358 = vld [vmem:[%s336 + $0x150] sm:$0xff]
      %v359 = vld [vmem:[%s336 + $0x158] sm:$0xff]
      %v360 = vld [vmem:[%s336 + $0x160] sm:$0x1]
      %v361 = vmax.f32 %v312, %v337
      %v362 = vmax.f32 %v313, %v338
      %v363 = vmax.f32 %v314, %v339
      %v364 = vmax.f32 %v315, %v340
      %v365 = vmax.f32 %v316, %v341
      %v366 = vmax.f32 %v317, %v342
      %v367 = vmax.f32 %v318, %v343
      %v368 = vmax.f32 %v319, %v344
      %v369 = vmax.f32 %v320, %v345
      %v370 = vmax.f32 %v321, %v346
      %v371 = vmax.f32 %v322, %v347
      %v372 = vmax.f32 %v323, %v348
      %v373 = vmax.f32 %v324, %v349
      %v374 = vmax.f32 %v325, %v350
      %v375 = vmax.f32 %v326, %v351
      %v376 = vmax.f32 %v327, %v352
      %v377 = vmax.f32 %v328, %v353
      %v378 = vmax.f32 %v329, %v354
      %v379 = vmax.f32 %v330, %v355
      %v380 = vmax.f32 %v331, %v356
      %v381 = vmax.f32 %v332, %v357
      %v382 = vmax.f32 %v333, %v358
      %v383 = vmax.f32 %v334, %v359
      %v384 = vmax.f32 %v335, %v360
      %385 = vst [vmem:[#allocation3] sm:$0xff] %v361
      %386 = vst [vmem:[#allocation3 + $0x8] sm:$0xff] %v362
      %387 = vst [vmem:[#allocation3 + $0x10] sm:$0x1] %v363
      %388 = vst [vmem:[#allocation3 + $0x18] sm:$0xff] %v364
      %389 = vst [vmem:[#allocation3 + $0x20] sm:$0xff] %v365
      %390 = vst [vmem:[#allocation3 + $0x28] sm:$0x1] %v366
      %391 = vst [vmem:[#allocation3 + $0x30] sm:$0xff] %v367
      %392 = vst [vmem:[#allocation3 + $0x38] sm:$0xff] %v368
      %393 = vst [vmem:[#allocation3 + $0x40] sm:$0x1] %v369
      %394 = vst [vmem:[#allocation3 + $0x48] sm:$0xff] %v370
      %395 = vst [vmem:[#allocation3 + $0x50] sm:$0xff] %v371
      %396 = vst [vmem:[#allocation3 + $0x58] sm:$0x1] %v372
      %397 = vst [vmem:[#allocation3 + $0x60] sm:$0xff] %v373
      %398 = vst [vmem:[#allocation3 + $0x68] sm:$0xff] %v374
      %399 = vst [vmem:[#allocation3 + $0x70] sm:$0x1] %v375
      %400 = vst [vmem:[#allocation3 + $0x78] sm:$0xff] %v376
      %401 = vst [vmem:[#allocation3 + $0x80] sm:$0xff] %v377
      %402 = vst [vmem:[#allocation3 + $0x88] sm:$0x1] %v378
      %403 = vst [vmem:[#allocation3 + $0x90] sm:$0xff] %v379
      %404 = vst [vmem:[#allocation3 + $0x98] sm:$0xff] %v380
      %405 = vst [vmem:[#allocation3 + $0xa0] sm:$0x1] %v381
      %406 = vst [vmem:[#allocation3 + $0xa8] sm:$0xff] %v382
      %407 = vst [vmem:[#allocation3 + $0xb0] sm:$0xff] %v383
      %408 = vst [vmem:[#allocation3 + $0xb8] sm:$0x1] %v384
      %v409 = vld [vmem:[#allocation3] ss:$2 sm:$0xff]
      %s410 = scalar_lea.vmem [#allocation3], 24
      %v411 = vld [vmem:[%s410] ss:$2 sm:$0xff]
      %s412 = scalar_lea.vmem [#allocation3], 48
      %v413 = vld [vmem:[%s412] ss:$2 sm:$0xff]
      %s414 = scalar_lea.vmem [#allocation3], 72
      %v415 = vld [vmem:[%s414] ss:$2 sm:$0xff]
      %s416 = scalar_lea.vmem [#allocation3], 96
      %v417 = vld [vmem:[%s416] ss:$2 sm:$0xff]
      %s418 = scalar_lea.vmem [#allocation3], 120
      %v419 = vld [vmem:[%s418] ss:$2 sm:$0xff]
      %s420 = scalar_lea.vmem [#allocation3], 144
      %v421 = vld [vmem:[%s420] ss:$2 sm:$0xff]
      %s422 = scalar_lea.vmem [#allocation3], 168
      %v423 = vld [vmem:[%s422] ss:$2 sm:$0xff]
      %s424 = scalar_lea.vmem [#allocation3], 1
      %v425 = vld [vmem:[%s424] ss:$2 sm:$0xff]
      %s426 = scalar_lea.vmem [#allocation3], 25
      %v427 = vld [vmem:[%s426] ss:$2 sm:$0xff]
      %s428 = scalar_lea.vmem [#allocation3], 49
      %v429 = vld [vmem:[%s428] ss:$2 sm:$0xff]
      %s430 = scalar_lea.vmem [#allocation3], 73
      %v431 = vld [vmem:[%s430] ss:$2 sm:$0xff]
      %s432 = scalar_lea.vmem [#allocation3], 97
      %v433 = vld [vmem:[%s432] ss:$2 sm:$0xff]
      %s434 = scalar_lea.vmem [#allocation3], 121
      %v435 = vld [vmem:[%s434] ss:$2 sm:$0xff]
      %s436 = scalar_lea.vmem [#allocation3], 145
      %v437 = vld [vmem:[%s436] ss:$2 sm:$0xff]
      %s438 = scalar_lea.vmem [#allocation3], 169
      %v439 = vld [vmem:[%s438] ss:$2 sm:$0xff]
      %v440 = vmax.f32 %v409, %v425
      %v441 = vmax.f32 %v411, %v427
      %v442 = vmax.f32 %v413, %v429
      %v443 = vmax.f32 %v415, %v431
      %v444 = vmax.f32 %v417, %v433
      %v445 = vmax.f32 %v419, %v435
      %v446 = vmax.f32 %v421, %v437
      %v447 = vmax.f32 %v423, %v439
      %s448 = scalar_lea.vmem [#allocation3], 2
      %v449 = vld [vmem:[%s448] ss:$2 sm:$0xff]
      %s450 = scalar_lea.vmem [#allocation3], 26
      %v451 = vld [vmem:[%s450] ss:$2 sm:$0xff]
      %s452 = scalar_lea.vmem [#allocation3], 50
      %v453 = vld [vmem:[%s452] ss:$2 sm:$0xff]
      %s454 = scalar_lea.vmem [#allocation3], 74
      %v455 = vld [vmem:[%s454] ss:$2 sm:$0xff]
      %s456 = scalar_lea.vmem [#allocation3], 98
      %v457 = vld [vmem:[%s456] ss:$2 sm:$0xff]
      %s458 = scalar_lea.vmem [#allocation3], 122
      %v459 = vld [vmem:[%s458] ss:$2 sm:$0xff]
      %s460 = scalar_lea.vmem [#allocation3], 146
      %v461 = vld [vmem:[%s460] ss:$2 sm:$0xff]
      %s462 = scalar_lea.vmem [#allocation3], 170
      %v463 = vld [vmem:[%s462] ss:$2 sm:$0xff]
      %v464 = vmax.f32 %v440, %v449
      %v465 = vmax.f32 %v441, %v451
      %v466 = vmax.f32 %v442, %v453
      %v467 = vmax.f32 %v443, %v455
      %v468 = vmax.f32 %v444, %v457
      %v469 = vmax.f32 %v445, %v459
      %v470 = vmax.f32 %v446, %v461
      %v471 = vmax.f32 %v447, %v463
      %472 = vst [vmem:[%s147] sm:$0xff] %v464
      %473 = vst [vmem:[%s147 + $0x8] sm:$0xff] %v465
      %474 = vst [vmem:[%s147 + $0x10] sm:$0xff] %v466
      %475 = vst [vmem:[%s147 + $0x18] sm:$0xff] %v467
      %476 = vst [vmem:[%s147 + $0x20] sm:$0xff] %v468
      %477 = vst [vmem:[%s147 + $0x28] sm:$0xff] %v469
      %478 = vst [vmem:[%s147 + $0x30] sm:$0xff] %v470
      %479 = vst [vmem:[%s147 + $0x38] sm:$0xff] %v471
      %p480 = scmp.lt.s32.totalorder %s17, 7
      %s481 = scalar_select %p480, %s17, 7
      %p482 = scmp.lt.s32.totalorder %s16, 0
      %s483 = scalar_select %p482, %s16, 0
      %s484 = smul.addr %s481, 8
      %s485 = sadd.s32 %s483, %s484
      %s486 = smul.addr %s485, 8
      %s487 = scalar_lea.vmem %s1, %s486
      // Predicated region
      $region25: #{maxpool3d_tf_pallas.1} parent=23 // pred_check
        %p488 = pneg %p72
      $region26: #{maxpool3d_tf_pallas.1} parent=23 // pred_check_branch
        %490 = sbr.rel (%p488) target = $region28
      $region27: #{maxpool3d_tf_pallas.1} parent=23 // pred_region
        _
      $region28: #{maxpool3d_tf_pallas.1} parent=23 // pred_fallthru
        _
    $region24: #{maxpool3d_tf_pallas.1} parent=5 // pred_fallthru
      _
    %p491 = scmp.le.s32.totalorder 2, %s7
    // Predicated region
    $region29: #{maxpool3d_tf_pallas.1} parent=5 // pred_check
      %p492 = pneg %p491
    $region30: #{maxpool3d_tf_pallas.1} parent=5 // pred_check_branch
      %494 = sbr.rel (%p492) target = $region32
    $region31: #{maxpool3d_tf_pallas.1} parent=5 // pred_region
      %s495 = ssub.s32 %s7, 2
      // Predicated region
      $region33: #{maxpool3d_tf_pallas.1} parent=31 // pred_check
        %p496 = pneg %p78
      $region34: #{maxpool3d_tf_pallas.1} parent=31 // pred_check_branch
        %498 = sbr.rel (%p496) target = $region36
      $region35: #{maxpool3d_tf_pallas.1} parent=31 // pred_region
        %p499 = scmp.lt.s32.totalorder %s19, 7
        %s500 = scalar_select %p499, %s19, 7
        %p501 = scmp.lt.s32.totalorder %s18, 0
        %s502 = scalar_select %p501, %s18, 0
        %s503 = smul.addr %s500, 8
        %s504 = sadd.s32 %s502, %s503
        %s505 = smul.addr %s504, 8
        %s506 = scalar_lea.vmem %s1, %s505
      $region36: #{maxpool3d_tf_pallas.1} parent=31 // pred_fallthru
        _
    $region32: #{maxpool3d_tf_pallas.1} parent=5 // pred_fallthru
      _
  $region6: #{maxpool3d_tf_pallas.1} parent=0 // loop_footer
    %s11 = sadd.s32 1, %s7
  $region7: #{maxpool3d_tf_pallas.1} parent=0 // loop_footer_branch
    %6 = sbr.rel target = $region3
  $region8: #{maxpool3d_tf_pallas.1} parent=0 // loop_exit
    _

</llo_original>
